<compile_context>
chip_gen: v6e
topology: v6e:2x2x1
jax: 0.10.0
libtpu: 0.0.40
codegen_flags: <defaults>
</compile_context>

<pallas_src>
import numpy as np
import jax
import jax.numpy as jnp
from jax import lax
from jax.experimental import pallas as pl
from jax.experimental.pallas import tpu as pltpu

NUM_DIRECTIONS = 4
NEG_SLOPE = 0.01      # PyTorch nn.LeakyReLU default negative_slope
LANE = 128            # lane alignment
ROW_ALIGN = 16        # bf16 sublane-packing granularity
TILE_B_MAX = 128      # batch-tile rows; keeps (tile, 384) f32 intermediates small
                      # enough for v7x's 64 MiB VMEM as well as v5e/v6e.


def _round_up(x, m):
    return ((x + m - 1) // m) * m


def _leaky(x):
    return jnp.where(x > 0, x, NEG_SLOPE * x)


# -----------------------------------------------------------------------------
# One-time weight packing (hoisted out of the per-call forward path).
# -----------------------------------------------------------------------------
def _pack_slab(named_mats, slab_cols):
    """Stack matrices into one bf16 slab; row starts 16-aligned."""
    offsets, blocks, cur = {}, [], 0
    for name, m in named_mats:
        m = jnp.asarray(m, jnp.float32)
        nr, nc = int(m.shape[0]), int(m.shape[1])
        nr_pad = _round_up(nr, ROW_ALIGN)
        blocks.append(jnp.pad(m, ((0, nr_pad - nr), (0, slab_cols - nc))))
        offsets[name] = (cur, nr, nc)          # static ints baked into the kernel
        cur += nr_pad
    return jnp.concatenate(blocks, axis=0).astype(jnp.bfloat16), offsets


def pack_weights(params, *, kernel_size, height, width):
    """Re-layout all torch-style weights into TWO bf16 slabs.

    Slab A (wide, 384 cols): block-diagonal conv1 weight + its bias.
    Slab B (narrow, 192 cols): every other matrix/bias.
    """
    K = kernel_size
    Cin = params["conv1_w"].shape[1]
    Cmid = params["conv1_w"].shape[0]
    OH, OW = height - K + 1, width - K + 1
    P = OH * OW
    # Flatten -> Linear(64, 64) in the module forces conv2's spatial output to
    # be 1x1, i.e. conv1's output is K x K (image is (2K-1) x (2K-1)).
    assert OH == K and OW == K, "image must be (2*kernel_size-1) square"

    C2 = params["conv2_w"].shape[0]
    Fdir = params["fc_dir_w"].shape[0]
    Ndir = params["fc_dir_w"].shape[1]          # NUM_DIRECTIONS * n_agents
    Dimg = params["fc_img_w"].shape[0]
    NA = params["head3_w"].shape[0]

    n_patch = P * K * K * Cin                   # 243 at these shapes
    act_cols = _round_up(n_patch, LANE)         # 256
    c1_cols = _round_up(P * Cmid, LANE)         # 384
    out_cols = _round_up(NA, LANE)              # 128
    # The direction one-hot is folded into the zero tail of the patch tile.
    assert n_patch + Ndir <= act_cols, "one-hot does not fit in patch-tile tail"
    assert Ndir <= LANE

    f32 = jnp.float32

    # conv1 as a block-diagonal matmul producing (pos, ch)-ordered columns.
    w1f = jnp.transpose(params["conv1_w"], (2, 3, 1, 0)).reshape(K * K * Cin, Cmid)
    w_bd = jnp.kron(jnp.eye(P, dtype=f32), w1f.astype(f32))            # (243, 288)
    w_bd = jnp.pad(w_bd, ((0, act_cols - n_patch), (0, c1_cols - P * Cmid)))
    b1 = jnp.pad(jnp.tile(params["conv1_b"].astype(f32), (P,)),
                 (0, c1_cols - P * Cmid))[None, :]                      # (1, 384)

    # conv2 (1x1 spatial output) as a plain matmul; row order (kh, kw, ci)
    # matches the (pos, ch) column order of the conv1 output above.  Rows are
    # zero-padded to c1_cols so the full 384-wide h1 can be fed in.
    w2 = jnp.transpose(params["conv2_w"], (2, 3, 1, 0)).reshape(K * K * Cmid, C2)
    w2 = jnp.pad(w2.astype(f32), ((0, c1_cols - K * K * Cmid), (0, 0)))
    b2 = params["conv2_b"][None, :]

    wimg = params["fc_img_w"].T
    bimg = params["fc_img_b"][None, :]

    # fc_dir consumes the lane-aligned slice x[:, act_cols-128 : act_cols]:
    # the leading rows (patch data) get zero weights, the last Ndir rows hold
    # the real fc_dir weights (the one-hot sits in the last Ndir columns).
    wdir = jnp.zeros((LANE, Fdir), f32).at[LANE - Ndir:, :].set(
        params["fc_dir_w"].T.astype(f32))
    bdir = params["fc_dir_b"][None, :]

    # Split head1 so the concat([img, dir]) becomes two matmuls.
    wh1 = params["head1_w"].T                    # (Dimg + Fdir, 192)
    wh1a, wh1b = wh1[:Dimg], wh1[Dimg:]
    bh1 = params["head1_b"][None, :]

    wh2 = params["head2_w"].T
    bh2 = params["head2_b"][None, :]

    # Lane-pad the final projection so the kernel output is lane-dense.
    wh3 = jnp.pad(params["head3_w"].T.astype(f32), ((0, 0), (0, out_cols - NA)))
    bh3 = jnp.pad(params["head3_b"].astype(f32), (0, out_cols - NA))[None, :]

    w_wide, off_wide = _pack_slab([("w_bd", w_bd), ("b1", b1)], c1_cols)
    w_narrow, off_narrow = _pack_slab(
        [("w2", w2), ("b2", b2),
         ("wimg", wimg), ("bimg", bimg),
         ("wdir", wdir), ("bdir", bdir),
         ("wh1a", wh1a), ("wh1b", wh1b), ("bh1", bh1),
         ("wh2", wh2), ("bh2", bh2),
         ("wh3", wh3), ("bh3", bh3)],
        slab_cols=192)

    meta = dict(act_cols=act_cols, out_cols=out_cols, n_actions=NA, n_dir=Ndir)
    return w_wide, w_narrow, off_wide, off_narrow, meta


# -----------------------------------------------------------------------------
# Pallas kernel (generated once with static offsets baked in).
# -----------------------------------------------------------------------------
def make_kernel(off_wide, off_narrow, act_cols):
    def seg(ref, offs, name):
        r0, nr, nc = offs[name]
        return ref[r0:r0 + nr, 0:nc]              # static slice of the slab

    def kernel(x_ref, wa_ref, wb_ref, out_ref):
        def dot(a, b):
            # bf16 x bf16 -> single MXU pass, f32 accumulation.
            return jnp.dot(a.astype(jnp.bfloat16), b,
                           preferred_element_type=jnp.float32)

        wa = lambda n: seg(wa_ref, off_wide, n)
        wb = lambda n: seg(wb_ref, off_narrow, n)

        x = x_ref[...]                             # (Tb, act_cols) bf16
        dirs = x[:, act_cols - LANE:]              # last 128-lane tile (one-hot tail)

        # conv1 (block-diagonal weight) + LeakyReLU -> (Tb, 384), (pos, ch) order
        h = _leaky(dot(x, wa("w_bd")) + wa("b1"))
        # conv2 (1x1 spatial output) + LeakyReLU -> (Tb, 64)
        h = _leaky(dot(h, wb("w2")) + wb("b2"))
        # image head Linear(64, 64) + LeakyReLU
        img = _leaky(dot(h, wb("wimg")) + wb("bimg"))
        # direction branch Linear + ReLU (one-hot folded into x's tail columns)
        dfe = jnp.maximum(dot(dirs, wb("wdir")) + wb("bdir"), 0.0)
        # head: the concat is folded into two matmuls on split head1 weights
        g = jnp.maximum(dot(img, wb("wh1a")) + dot(dfe, wb("wh1b")) + wb("bh1"), 0.0)
        g = jnp.maximum(dot(g, wb("wh2")) + wb("bh2"), 0.0)
        out_ref[...] = dot(g, wb("wh3")) + wb("bh3")

    return kernel


# -----------------------------------------------------------------------------
# Forward builder: packs weights once, returns a jitted forward(image, dirs).
# -----------------------------------------------------------------------------
def build_forward(params, *, kernel_size, height, width):
    w_wide, w_narrow, off_wide, off_narrow, meta = pack_weights(
        params, kernel_size=kernel_size, height=height, width=width)
    kernel = make_kernel(off_wide, off_narrow, meta["act_cols"])
    K = kernel_size
    act_cols, out_cols = meta["act_cols"], meta["out_cols"]
    n_actions, n_dir = meta["n_actions"], meta["n_dir"]

    def forward(image, direction, w_wide, w_narrow):
        x = image.astype(jnp.float32)
        if x.ndim == 3:                     # matches process_image's unsqueeze(0)
            x = x[None]
        B, H, W, Cin = x.shape
        OH, OW = H - K + 1, W - K + 1

        dirs = jnp.asarray(direction)
        if dirs.ndim == 1:
            if B != 1:
                raise ValueError("1-D direction requires a single-image batch")
            dirs = dirs[None]
        if dirs.shape[0] != B:
            raise ValueError("image / direction batch dims do not match")
        onehot = jax.nn.one_hot(dirs.astype(jnp.int32), NUM_DIRECTIONS,
                                dtype=jnp.float32).reshape(B, -1)
        assert onehot.shape[1] == n_dir

        # im2col, batch-major rows, columns ordered (position, kh, kw, ci).
        cols = []
        for oh in range(OH):
            for ow in range(OW):
                cols.append(x[:, oh:oh + K, ow:ow + K, :].reshape(B, K * K * Cin))
        patches = jnp.concatenate(cols, axis=1)                 # (B, 243)

        # Batch tile / padding (16-row multiples for clean bf16 sublane packing).
        tile_b = min(_round_up(max(B, 16), 16), TILE_B_MAX)
        b_pad = _round_up(max(B, tile_b), tile_b)

        # One bf16 activation slab: patches, with the one-hot folded into the
        # zero tail of the last 128-lane tile.
        x_slab = jnp.zeros((b_pad, act_cols), jnp.float32)
        x_slab = x_slab.at[:B, :patches.shape[1]].set(patches)
        x_slab = x_slab.at[:B, act_cols - n_dir:].set(onehot)
        x_slab = x_slab.astype(jnp.bfloat16)

        grid = (b_pad // tile_b,)
        out = pl.pallas_call(
            kernel,
            out_shape=jax.ShapeDtypeStruct((b_pad, out_cols), jnp.float32),
            grid=grid,
            in_specs=[
                # activations: tiled over batch rows
                pl.BlockSpec((tile_b, act_cols), lambda i: (i, 0)),
                # weight slabs: constant index_map -> DMA'd once, VMEM-resident
                pl.BlockSpec(tuple(w_wide.shape), lambda i: (0, 0)),
                pl.BlockSpec(tuple(w_narrow.shape), lambda i: (0, 0)),
            ],
            out_specs=pl.BlockSpec((tile_b, out_cols), lambda i: (i, 0)),
            compiler_params=pltpu.CompilerParams(
                dimension_semantics=("parallel",)),
        )(x_slab, w_wide, w_narrow)
        return out[:B, :n_actions]

    fwd = jax.jit(forward)
    return lambda image, direction: fwd(image, direction, w_wide, w_narrow)


# -----------------------------------------------------------------------------
# Pure-JAX f32 reference replicating the PyTorch forward (NCHW convs, x@W.T+b).
# -----------------------------------------------------------------------------
def reference_forward(image, direction, params):
    hp = jax.lax.Precision.HIGHEST
    mm = lambda a, w: jnp.dot(a, w.T, precision=hp)
    x = image.astype(jnp.float32)
    if x.ndim == 3:
        x = x[None]
    B = x.shape[0]
    x = jnp.transpose(x, (0, 3, 1, 2))                       # NCHW
    dn = ("NCHW", "OIHW", "NCHW")
    h = lax.conv_general_dilated(x, params["conv1_w"], (1, 1), "VALID",
                                 dimension_numbers=dn, precision=hp)
    h = _leaky(h + params["conv1_b"][None, :, None, None])
    h = lax.conv_general_dilated(h, params["conv2_w"], (1, 1), "VALID",
                                 dimension_numbers=dn, precision=hp)
    h = _leaky(h + params["conv2_b"][None, :, None, None])
    h = h.reshape(B, -1)                                     # Flatten -> (B, 64)
    img = _leaky(mm(h, params["fc_img_w"]) + params["fc_img_b"]).reshape(B, -1)
    dirs = jnp.asarray(direction)
    if dirs.ndim == 1:
        dirs = dirs[None]
    onehot = jax.nn.one_hot(dirs.astype(jnp.int32), NUM_DIRECTIONS,
                            dtype=jnp.float32).reshape(B, -1)
    dfe = jax.nn.relu(mm(onehot, params["fc_dir_w"]) + params["fc_dir_b"])
    feat = jnp.concatenate([img, dfe], axis=-1)
    g = jax.nn.relu(mm(feat, params["head1_w"]) + params["head1_b"])
    g = jax.nn.relu(mm(g, params["head2_w"]) + params["head2_b"])
    return mm(g, params["head3_w"]) + params["head3_b"]


if __name__ == "__main__":
    B, n_agents, n_actions = 2, 3, 7
    kernel_size, fc_direction = 3, 32
    # Flatten -> Linear(64, 64) requires the second conv's spatial output to be
    # 1x1, i.e. H = W = 2*kernel_size - 1.
    H = W = 2 * kernel_size - 1

    key = jax.random.PRNGKey(0)
    keys = jax.random.split(key, 16)

    def nrm(k, shape, scale=0.1):
        return scale * jax.random.normal(k, shape, jnp.float32)

    params = {
        "conv1_w": nrm(keys[0], (32, 3, kernel_size, kernel_size)),
        "conv1_b": nrm(keys[1], (32,)),
        "conv2_w": nrm(keys[2], (64, 32, kernel_size, kernel_size)),
        "conv2_b": nrm(keys[3], (64,)),
        "fc_img_w": nrm(keys[4], (64, 64)),
        "fc_img_b": nrm(keys[5], (64,)),
        "fc_dir_w": nrm(keys[6], (fc_direction, NUM_DIRECTIONS * n_agents)),
        "fc_dir_b": nrm(keys[7], (fc_direction,)),
        "head1_w": nrm(keys[8], (192, 64 + fc_direction)),
        "head1_b": nrm(keys[9], (192,)),
        "head2_w": nrm(keys[10], (64, 192)),
        "head2_b": nrm(keys[11], (64,)),
        "head3_w": nrm(keys[12], (n_actions, 64)),
        "head3_b": nrm(keys[13], (n_actions,)),
    }

    # obs['image'] is HWC grid data; obs['direction'] is per-agent ints.
    image = jax.random.randint(keys[14], (B, H, W, 3), 0, 6).astype(jnp.float32)
    direction = jax.random.randint(keys[15], (B, n_agents), 0, NUM_DIRECTIONS)

    # Pack weights / build kernel once; per-call path is glue + one pallas_call.
    forward = build_forward(params, kernel_size=kernel_size, height=H, width=W)

    out = forward(image, direction)
    out = jax.block_until_ready(out)

    ref = reference_forward(image, direction, params)
    # bf16 matmul inputs vs. an f32 'highest' reference: bf16-appropriate tolerance.
    np.testing.assert_allclose(np.asarray(out), np.asarray(ref),
                               rtol=2e-2, atol=2e-2)
    print("KERNEL_OK")
</pallas_src>

<mosaic_0001>
module attributes {stable_mosaic.version = 11 : i64} {
  func.func @kernel(%arg0: i32, %arg1: memref<16x256xbf16, #tpu.memory_space<vmem>>, %arg2: memref<272x384xbf16, #tpu.memory_space<vmem>>, %arg3: memref<1024x192xbf16, #tpu.memory_space<vmem>>, %arg4: memref<16x128xf32, #tpu.memory_space<vmem>>) attributes {dimension_semantics = [#tpu.dimension_semantics<parallel>], iteration_bounds = array<i64: 1>, scalar_prefetch = 0 : i64, scratch_operands = 0 : i64, tpu.core_type = #tpu.core_type<tc>, window_params = [{transform_indices = @transform_0, window_bounds = array<i64: 16, 256>}, {pipeline_mode = #tpu.pipeline_mode<synchronous>, transform_indices = @transform_1, window_bounds = array<i64: 272, 384>}, {pipeline_mode = #tpu.pipeline_mode<synchronous>, transform_indices = @transform_2, window_bounds = array<i64: 1024, 192>}, {transform_indices = @transform_3, window_bounds = array<i64: 16, 128>}]} {
    %c0 = arith.constant 0 : index
    %c0_0 = arith.constant 0 : index
    %0 = vector.load %arg1[%c0, %c0_0] : memref<16x256xbf16, #tpu.memory_space<vmem>>, vector<16x256xbf16>
    %1 = vector.extract_strided_slice %0 {offsets = [0, 128], sizes = [16, 128], strides = [1, 1]} : vector<16x256xbf16> to vector<16x128xbf16>
    %c0_1 = arith.constant 0 : index
    %c0_2 = arith.constant 0 : index
    %2 = vector.load %arg2[%c0_1, %c0_2] : memref<272x384xbf16, #tpu.memory_space<vmem>>, vector<256x384xbf16>
    %cst = arith.constant dense<0.000000e+00> : vector<16x384xf32>
    %3 = tpu.matmul %0, %2, %cst {dimension_numbers = #tpu.dot_dimension_numbers<[1], [0], [0], [1], [0, 0, 1, 1], [], []>} : vector<16x256xbf16>, vector<256x384xbf16>, vector<16x384xf32> -> vector<16x384xf32>
    %c256 = arith.constant 256 : index
    %c0_3 = arith.constant 0 : index
    %4 = vector.load %arg2[%c256, %c0_3] : memref<272x384xbf16, #tpu.memory_space<vmem>>, vector<1x384xbf16>
    %5 = arith.extf %4 : vector<1x384xbf16> to vector<1x384xf32>
    %6 = vector.broadcast %5 : vector<1x384xf32> to vector<16x384xf32>
    %7 = arith.addf %3, %6 : vector<16x384xf32>
    %cst_4 = arith.constant 0.000000e+00 : f32
    %8 = vector.broadcast %cst_4 : f32 to vector<16x384xf32>
    %9 = arith.cmpf ogt, %7, %8 : vector<16x384xf32>
    %cst_5 = arith.constant 0.00999999977 : f32
    %10 = vector.broadcast %cst_5 : f32 to vector<16x384xf32>
    %11 = arith.mulf %10, %7 : vector<16x384xf32>
    %12 = arith.select %9, %7, %11 : vector<16x384xi1>, vector<16x384xf32>
    %c0_6 = arith.constant 0 : index
    %c0_7 = arith.constant 0 : index
    %13 = vector.load %arg3[%c0_6, %c0_7] : memref<1024x192xbf16, #tpu.memory_space<vmem>>, vector<384x64xbf16>
    %14 = arith.truncf %12 : vector<16x384xf32> to vector<16x384xbf16>
    %cst_8 = arith.constant dense<0.000000e+00> : vector<16x64xf32>
    %15 = tpu.matmul %14, %13, %cst_8 {dimension_numbers = #tpu.dot_dimension_numbers<[1], [0], [0], [1], [0, 0, 1, 1], [], []>} : vector<16x384xbf16>, vector<384x64xbf16>, vector<16x64xf32> -> vector<16x64xf32>
    %c384 = arith.constant 384 : index
    %c0_9 = arith.constant 0 : index
    %16 = vector.load %arg3[%c384, %c0_9] : memref<1024x192xbf16, #tpu.memory_space<vmem>>, vector<1x64xbf16>
    %17 = arith.extf %16 : vector<1x64xbf16> to vector<1x64xf32>
    %18 = vector.broadcast %17 : vector<1x64xf32> to vector<16x64xf32>
    %19 = arith.addf %15, %18 : vector<16x64xf32>
    %cst_10 = arith.constant 0.000000e+00 : f32
    %20 = vector.broadcast %cst_10 : f32 to vector<16x64xf32>
    %21 = arith.cmpf ogt, %19, %20 : vector<16x64xf32>
    %cst_11 = arith.constant 0.00999999977 : f32
    %22 = vector.broadcast %cst_11 : f32 to vector<16x64xf32>
    %23 = arith.mulf %22, %19 : vector<16x64xf32>
    %24 = arith.select %21, %19, %23 : vector<16x64xi1>, vector<16x64xf32>
    %c400 = arith.constant 400 : index
    %c0_12 = arith.constant 0 : index
    %25 = vector.load %arg3[%c400, %c0_12] : memref<1024x192xbf16, #tpu.memory_space<vmem>>, vector<64x64xbf16>
    %26 = arith.truncf %24 : vector<16x64xf32> to vector<16x64xbf16>
    %cst_13 = arith.constant dense<0.000000e+00> : vector<16x64xf32>
    %27 = tpu.matmul %26, %25, %cst_13 {dimension_numbers = #tpu.dot_dimension_numbers<[1], [0], [0], [1], [0, 0, 1, 1], [], []>} : vector<16x64xbf16>, vector<64x64xbf16>, vector<16x64xf32> -> vector<16x64xf32>
    %c464 = arith.constant 464 : index
    %c0_14 = arith.constant 0 : index
    %28 = vector.load %arg3[%c464, %c0_14] : memref<1024x192xbf16, #tpu.memory_space<vmem>>, vector<1x64xbf16>
    %29 = arith.extf %28 : vector<1x64xbf16> to vector<1x64xf32>
    %30 = vector.broadcast %29 : vector<1x64xf32> to vector<16x64xf32>
    %31 = arith.addf %27, %30 : vector<16x64xf32>
    %cst_15 = arith.constant 0.000000e+00 : f32
    %32 = vector.broadcast %cst_15 : f32 to vector<16x64xf32>
    %33 = arith.cmpf ogt, %31, %32 : vector<16x64xf32>
    %cst_16 = arith.constant 0.00999999977 : f32
    %34 = vector.broadcast %cst_16 : f32 to vector<16x64xf32>
    %35 = arith.mulf %34, %31 : vector<16x64xf32>
    %36 = arith.select %33, %31, %35 : vector<16x64xi1>, vector<16x64xf32>
    %c480 = arith.constant 480 : index
    %c0_17 = arith.constant 0 : index
    %37 = vector.load %arg3[%c480, %c0_17] : memref<1024x192xbf16, #tpu.memory_space<vmem>>, vector<128x32xbf16>
    %cst_18 = arith.constant dense<0.000000e+00> : vector<16x32xf32>
    %38 = tpu.matmul %1, %37, %cst_18 {dimension_numbers = #tpu.dot_dimension_numbers<[1], [0], [0], [1], [0, 0, 1, 1], [], []>} : vector<16x128xbf16>, vector<128x32xbf16>, vector<16x32xf32> -> vector<16x32xf32>
    %c608 = arith.constant 608 : index
    %c0_19 = arith.constant 0 : index
    %39 = vector.load %arg3[%c608, %c0_19] : memref<1024x192xbf16, #tpu.memory_space<vmem>>, vector<1x32xbf16>
    %40 = arith.extf %39 : vector<1x32xbf16> to vector<1x32xf32>
    %41 = vector.broadcast %40 : vector<1x32xf32> to vector<16x32xf32>
    %42 = arith.addf %38, %41 : vector<16x32xf32>
    %cst_20 = arith.constant 0.000000e+00 : f32
    %43 = vector.broadcast %cst_20 : f32 to vector<16x32xf32>
    %44 = arith.maximumf %42, %43 : vector<16x32xf32>
    %c624 = arith.constant 624 : index
    %c0_21 = arith.constant 0 : index
    %45 = vector.load %arg3[%c624, %c0_21] : memref<1024x192xbf16, #tpu.memory_space<vmem>>, vector<64x192xbf16>
    %46 = arith.truncf %36 : vector<16x64xf32> to vector<16x64xbf16>
    %cst_22 = arith.constant dense<0.000000e+00> : vector<16x192xf32>
    %47 = tpu.matmul %46, %45, %cst_22 {dimension_numbers = #tpu.dot_dimension_numbers<[1], [0], [0], [1], [0, 0, 1, 1], [], []>} : vector<16x64xbf16>, vector<64x192xbf16>, vector<16x192xf32> -> vector<16x192xf32>
    %c688 = arith.constant 688 : index
    %c0_23 = arith.constant 0 : index
    %48 = vector.load %arg3[%c688, %c0_23] : memref<1024x192xbf16, #tpu.memory_space<vmem>>, vector<32x192xbf16>
    %49 = arith.truncf %44 : vector<16x32xf32> to vector<16x32xbf16>
    %cst_24 = arith.constant dense<0.000000e+00> : vector<16x192xf32>
    %50 = tpu.matmul %49, %48, %cst_24 {dimension_numbers = #tpu.dot_dimension_numbers<[1], [0], [0], [1], [0, 0, 1, 1], [], []>} : vector<16x32xbf16>, vector<32x192xbf16>, vector<16x192xf32> -> vector<16x192xf32>
    %51 = arith.addf %47, %50 : vector<16x192xf32>
    %c720 = arith.constant 720 : index
    %c0_25 = arith.constant 0 : index
    %52 = vector.load %arg3[%c720, %c0_25] : memref<1024x192xbf16, #tpu.memory_space<vmem>>, vector<1x192xbf16>
    %53 = arith.extf %52 : vector<1x192xbf16> to vector<1x192xf32>
    %54 = vector.broadcast %53 : vector<1x192xf32> to vector<16x192xf32>
    %55 = arith.addf %51, %54 : vector<16x192xf32>
    %cst_26 = arith.constant 0.000000e+00 : f32
    %56 = vector.broadcast %cst_26 : f32 to vector<16x192xf32>
    %57 = arith.maximumf %55, %56 : vector<16x192xf32>
    %c736 = arith.constant 736 : index
    %c0_27 = arith.constant 0 : index
    %58 = vector.load %arg3[%c736, %c0_27] : memref<1024x192xbf16, #tpu.memory_space<vmem>>, vector<192x64xbf16>
    %59 = arith.truncf %57 : vector<16x192xf32> to vector<16x192xbf16>
    %cst_28 = arith.constant dense<0.000000e+00> : vector<16x64xf32>
    %60 = tpu.matmul %59, %58, %cst_28 {dimension_numbers = #tpu.dot_dimension_numbers<[1], [0], [0], [1], [0, 0, 1, 1], [], []>} : vector<16x192xbf16>, vector<192x64xbf16>, vector<16x64xf32> -> vector<16x64xf32>
    %c928 = arith.constant 928 : index
    %c0_29 = arith.constant 0 : index
    %61 = vector.load %arg3[%c928, %c0_29] : memref<1024x192xbf16, #tpu.memory_space<vmem>>, vector<1x64xbf16>
    %62 = arith.extf %61 : vector<1x64xbf16> to vector<1x64xf32>
    %63 = vector.broadcast %62 : vector<1x64xf32> to vector<16x64xf32>
    %64 = arith.addf %60, %63 : vector<16x64xf32>
    %cst_30 = arith.constant 0.000000e+00 : f32
    %65 = vector.broadcast %cst_30 : f32 to vector<16x64xf32>
    %66 = arith.maximumf %64, %65 : vector<16x64xf32>
    %c944 = arith.constant 944 : index
    %c0_31 = arith.constant 0 : index
    %67 = vector.load %arg3[%c944, %c0_31] : memref<1024x192xbf16, #tpu.memory_space<vmem>>, vector<64x128xbf16>
    %68 = arith.truncf %66 : vector<16x64xf32> to vector<16x64xbf16>
    %cst_32 = arith.constant dense<0.000000e+00> : vector<16x128xf32>
    %69 = tpu.matmul %68, %67, %cst_32 {dimension_numbers = #tpu.dot_dimension_numbers<[1], [0], [0], [1], [0, 0, 1, 1], [], []>} : vector<16x64xbf16>, vector<64x128xbf16>, vector<16x128xf32> -> vector<16x128xf32>
    %c1008 = arith.constant 1008 : index
    %c0_33 = arith.constant 0 : index
    %70 = vector.load %arg3[%c1008, %c0_33] : memref<1024x192xbf16, #tpu.memory_space<vmem>>, vector<1x128xbf16>
    %71 = arith.extf %70 : vector<1x128xbf16> to vector<1x128xf32>
    %72 = vector.broadcast %71 : vector<1x128xf32> to vector<16x128xf32>
    %73 = arith.addf %69, %72 : vector<16x128xf32>
    %c0_34 = arith.constant 0 : index
    %c0_35 = arith.constant 0 : index
    %74 = vector.load %arg4[%c0_34, %c0_35] : memref<16x128xf32, #tpu.memory_space<vmem>>, vector<16x128xf32>
    tpu.vector_store %arg4[%c0_34, %c0_35], %73 {strides = array<i32>} : memref<16x128xf32, #tpu.memory_space<vmem>>, vector<16x128xf32>,
    return
  }
  func.func @transform_0(%arg0: i32) -> (i32, i32) {
    %c0_i32 = arith.constant 0 : i32
    %c0_i32_0 = arith.constant 0 : i32
    return %arg0, %c0_i32 : i32, i32
  }
  func.func @transform_1(%arg0: i32) -> (i32, i32) {
    %c0_i32 = arith.constant 0 : i32
    %c0_i32_0 = arith.constant 0 : i32
    %c0_i32_1 = arith.constant 0 : i32
    return %c0_i32, %c0_i32_0 : i32, i32
  }
  func.func @transform_2(%arg0: i32) -> (i32, i32) {
    %c0_i32 = arith.constant 0 : i32
    %c0_i32_0 = arith.constant 0 : i32
    %c0_i32_1 = arith.constant 0 : i32
    return %c0_i32, %c0_i32_0 : i32, i32
  }
  func.func @transform_3(%arg0: i32) -> (i32, i32) {
    %c0_i32 = arith.constant 0 : i32
    %c0_i32_0 = arith.constant 0 : i32
    return %arg0, %c0_i32 : i32, i32
  }
}

</mosaic_0001>

<llo_original>
// kernel: forward.1
$region0: #{forward.1}
  #allocation0 [shape = 'u32[]', space=smem, size = 0x4, offset = 0x4, fixed_abs, tag = 'smem constant byte address 0x4 - core index']
  #allocation1 [shape = 'u32[144,128]{1,0:T(1,128)}', space=vmem, size = 0x12000, scoped, tag = 'internal scratch']
  %s0 = inlined_call_operand.vmem [shape: bf16[16,256], index: 0, kind: input, shape index: {}]
  %s1 = inlined_call_operand.vmem [shape: bf16[272,384], index: 1, kind: input, shape index: {}]
  %s2 = inlined_call_operand.vmem [shape: bf16[1024,192], index: 2, kind: input, shape index: {}]
  %s3 = inlined_call_operand.vmem [shape: f32[16,128], index: 3, kind: output, shape index: {}]
  %s4 = sld [smem:[#allocation0]]
  $region22: #{forward.1} parent=0
    _
  %s6 = ssub.s32 1, %s4
  %s7 = scalar_select 0, %s6, %s4
  // Predicated region
  $region2: #{forward.1} parent=0 // pred_check
    _
  $region3: #{forward.1} parent=0 // pred_check_branch
    %9 = sbr.rel (0) target = $region5
  $region4: #{forward.1} parent=0 // pred_region
    _
  $region5: #{forward.1} parent=0 // pred_fallthru
    _
  // Predicated region
  $region6: #{forward.1} parent=0 // pred_check
    _
  $region7: #{forward.1} parent=0 // pred_check_branch
    %11 = sbr.rel (0) target = $region9
  $region8: #{forward.1} parent=0 // pred_region
    _
  $region9: #{forward.1} parent=0 // pred_fallthru
    _
  // Predicated region
  $region10: #{forward.1} parent=0 // pred_check
    _
  $region11: #{forward.1} parent=0 // pred_check_branch
    %13 = sbr.rel (0) target = $region13
  $region12: #{forward.1} parent=0 // pred_region
    _
  $region13: #{forward.1} parent=0 // pred_fallthru
    _
  %v15 = vld [vmem:[%s0] sm:$0xff]
  %v16 = vld [vmem:[%s0 + $0x8] sm:$0xff]
  %v17 = vld [vmem:[%s1] sm:$0xff]
  %v18 = vld [vmem:[%s1 + $0x8] sm:$0xf]
  %v19 = vld [vmem:[%s1 + $0xc] sm:$0xff]
  %v20 = vld [vmem:[%s1 + $0x14] sm:$0xf]
  %v21 = vld [vmem:[%s1 + $0x18] sm:$0xff]
  %v22 = vld [vmem:[%s1 + $0x20] sm:$0xf]
  %v23 = vld [vmem:[%s1 + $0x24] sm:$0xff]
  %v24 = vld [vmem:[%s1 + $0x2c] sm:$0xf]
  %v25 = vld [vmem:[%s1 + $0x30] sm:$0xff]
  %v26 = vld [vmem:[%s1 + $0x38] sm:$0xf]
  %v27 = vld [vmem:[%s1 + $0x3c] sm:$0xff]
  %v28 = vld [vmem:[%s1 + $0x44] sm:$0xf]
  %v29 = vld [vmem:[%s1 + $0x48] sm:$0xff]
  %v30 = vld [vmem:[%s1 + $0x50] sm:$0xf]
  %v31 = vld [vmem:[%s1 + $0x54] sm:$0xff]
  %v32 = vld [vmem:[%s1 + $0x5c] sm:$0xf]
  %v33 = vld [vmem:[%s1 + $0x60] sm:$0xff]
  %v34 = vld [vmem:[%s1 + $0x68] sm:$0xf]
  %v35 = vld [vmem:[%s1 + $0x6c] sm:$0xff]
  %v36 = vld [vmem:[%s1 + $0x74] sm:$0xf]
  %v37 = vld [vmem:[%s1 + $0x78] sm:$0xff]
  %v38 = vld [vmem:[%s1 + $0x80] sm:$0xf]
  %v39 = vld [vmem:[%s1 + $0x84] sm:$0xff]
  %v40 = vld [vmem:[%s1 + $0x8c] sm:$0xf]
  %v41 = vld [vmem:[%s1 + $0x90] sm:$0xff]
  %v42 = vld [vmem:[%s1 + $0x98] sm:$0xf]
  %v43 = vld [vmem:[%s1 + $0x9c] sm:$0xff]
  %v44 = vld [vmem:[%s1 + $0xa4] sm:$0xf]
  %v45 = vld [vmem:[%s1 + $0xa8] sm:$0xff]
  %v46 = vld [vmem:[%s1 + $0xb0] sm:$0xf]
  %v47 = vld [vmem:[%s1 + $0xb4] sm:$0xff]
  %v48 = vld [vmem:[%s1 + $0xbc] sm:$0xf]
  %v49 = vld [vmem:[%s1 + $0xc0] sm:$0xff]
  %v50 = vld [vmem:[%s1 + $0xc8] sm:$0xf]
  %v51 = vld [vmem:[%s1 + $0xcc] sm:$0xff]
  %v52 = vld [vmem:[%s1 + $0xd4] sm:$0xf]
  %v53 = vld [vmem:[%s1 + $0xd8] sm:$0xff]
  %v54 = vld [vmem:[%s1 + $0xe0] sm:$0xf]
  %v55 = vld [vmem:[%s1 + $0xe4] sm:$0xff]
  %v56 = vld [vmem:[%s1 + $0xec] sm:$0xf]
  %v57 = vld [vmem:[%s1 + $0xf0] sm:$0xff]
  %v58 = vld [vmem:[%s1 + $0xf8] sm:$0xf]
  %v59 = vld [vmem:[%s1 + $0xfc] sm:$0xff]
  %v60 = vld [vmem:[%s1 + $0x104] sm:$0xf]
  %v61 = vld [vmem:[%s1 + $0x108] sm:$0xff]
  %v62 = vld [vmem:[%s1 + $0x110] sm:$0xf]
  %v63 = vld [vmem:[%s1 + $0x114] sm:$0xff]
  %v64 = vld [vmem:[%s1 + $0x11c] sm:$0xf]
  %v65 = vld [vmem:[%s1 + $0x120] sm:$0xff]
  %v66 = vld [vmem:[%s1 + $0x128] sm:$0xf]
  %v67 = vld [vmem:[%s1 + $0x12c] sm:$0xff]
  %v68 = vld [vmem:[%s1 + $0x134] sm:$0xf]
  %v69 = vld [vmem:[%s1 + $0x138] sm:$0xff]
  %v70 = vld [vmem:[%s1 + $0x140] sm:$0xf]
  %v71 = vld [vmem:[%s1 + $0x144] sm:$0xff]
  %v72 = vld [vmem:[%s1 + $0x14c] sm:$0xf]
  %v73 = vld [vmem:[%s1 + $0x150] sm:$0xff]
  %v74 = vld [vmem:[%s1 + $0x158] sm:$0xf]
  %v75 = vld [vmem:[%s1 + $0x15c] sm:$0xff]
  %v76 = vld [vmem:[%s1 + $0x164] sm:$0xf]
  %v77 = vld [vmem:[%s1 + $0x168] sm:$0xff]
  %v78 = vld [vmem:[%s1 + $0x170] sm:$0xf]
  %v79 = vld [vmem:[%s1 + $0x174] sm:$0xff]
  %v80 = vld [vmem:[%s1 + $0x17c] sm:$0xf]
  %v81 = vld [vmem:[%s1 + $0x180] sm:$0x11]
  %v82 = vld [vmem:[%s1 + $0x188] sm:$0x1]
  %v83 = vunpack.c.l.bf16 %v81
  %v84 = vunpack.c.h.bf16 %v81
  %v85 = vunpack.c.l.bf16 %v82
  %v86 = vlaneseq
  %v87 = vshrl.u32 %v86, 7
  %v88 = vsub.s32 0, %v87
  %v89 = vrot.slane %v83, %v88
  %v90 = vlaneseq
  %v91 = vshrl.u32 %v90, 7
  %v92 = vsub.s32 0, %v91
  %v93 = vrot.slane %v84, %v92
  %v94 = vlaneseq
  %v95 = vshrl.u32 %v94, 7
  %v96 = vsub.s32 0, %v95
  %v97 = vrot.slane %v85, %v96
  %v100 = vunpack.c.l.b16 %v15
  %v101 = vunpack.c.h.b16 %v15
  %v102 = vunpack.c.l.b16 %v16
  %v103 = vunpack.c.h.b16 %v16
  %v104 = vpack.c.b16 %v102, %v100
  %v105 = vpack.c.b16 %v103, %v101
  %v172 = vunpack.c.l.b16 %v17
  %v173 = vunpack.c.h.b16 %v17
  %v174 = vunpack.c.l.b16 %v18
  %v175 = vunpack.c.l.b16 %v19
  %v176 = vunpack.c.h.b16 %v19
  %v177 = vunpack.c.l.b16 %v20
  %v178 = vunpack.c.l.b16 %v21
  %v179 = vunpack.c.h.b16 %v21
  %v180 = vunpack.c.l.b16 %v22
  %v181 = vunpack.c.l.b16 %v23
  %v182 = vunpack.c.h.b16 %v23
  %v183 = vunpack.c.l.b16 %v24
  %v184 = vunpack.c.l.b16 %v25
  %v185 = vunpack.c.h.b16 %v25
  %v186 = vunpack.c.l.b16 %v26
  %v187 = vunpack.c.l.b16 %v27
  %v188 = vunpack.c.h.b16 %v27
  %v189 = vunpack.c.l.b16 %v28
  %v190 = vunpack.c.l.b16 %v29
  %v191 = vunpack.c.h.b16 %v29
  %v192 = vunpack.c.l.b16 %v30
  %v193 = vunpack.c.l.b16 %v31
  %v194 = vunpack.c.h.b16 %v31
  %v195 = vunpack.c.l.b16 %v32
  %v196 = vunpack.c.l.b16 %v33
  %v197 = vunpack.c.h.b16 %v33
  %v198 = vunpack.c.l.b16 %v34
  %v199 = vunpack.c.l.b16 %v35
  %v200 = vunpack.c.h.b16 %v35
  %v201 = vunpack.c.l.b16 %v36
  %v202 = vunpack.c.l.b16 %v37
  %v203 = vunpack.c.h.b16 %v37
  %v204 = vunpack.c.l.b16 %v38
  %v205 = vunpack.c.l.b16 %v39
  %v206 = vunpack.c.h.b16 %v39
  %v207 = vunpack.c.l.b16 %v40
  %v208 = vunpack.c.l.b16 %v41
  %v209 = vunpack.c.h.b16 %v41
  %v210 = vunpack.c.l.b16 %v42
  %v211 = vunpack.c.l.b16 %v43
  %v212 = vunpack.c.h.b16 %v43
  %v213 = vunpack.c.l.b16 %v44
  %v214 = vunpack.c.l.b16 %v45
  %v215 = vunpack.c.h.b16 %v45
  %v216 = vunpack.c.l.b16 %v46
  %v217 = vunpack.c.l.b16 %v47
  %v218 = vunpack.c.h.b16 %v47
  %v219 = vunpack.c.l.b16 %v48
  %v220 = vunpack.c.l.b16 %v49
  %v221 = vunpack.c.h.b16 %v49
  %v222 = vunpack.c.l.b16 %v50
  %v223 = vunpack.c.l.b16 %v51
  %v224 = vunpack.c.h.b16 %v51
  %v225 = vunpack.c.l.b16 %v52
  %v226 = vunpack.c.l.b16 %v53
  %v227 = vunpack.c.h.b16 %v53
  %v228 = vunpack.c.l.b16 %v54
  %v229 = vunpack.c.l.b16 %v55
  %v230 = vunpack.c.h.b16 %v55
  %v231 = vunpack.c.l.b16 %v56
  %v232 = vunpack.c.l.b16 %v57
  %v233 = vunpack.c.h.b16 %v57
  %v234 = vunpack.c.l.b16 %v58
  %v235 = vunpack.c.l.b16 %v59
  %v236 = vunpack.c.h.b16 %v59
  %v237 = vunpack.c.l.b16 %v60
  %v238 = vunpack.c.l.b16 %v61
  %v239 = vunpack.c.h.b16 %v61
  %v240 = vunpack.c.l.b16 %v62
  %v241 = vunpack.c.l.b16 %v63
  %v242 = vunpack.c.h.b16 %v63
  %v243 = vunpack.c.l.b16 %v64
  %v244 = vunpack.c.l.b16 %v65
  %v245 = vunpack.c.h.b16 %v65
  %v246 = vunpack.c.l.b16 %v66
  %v247 = vunpack.c.l.b16 %v67
  %v248 = vunpack.c.h.b16 %v67
  %v249 = vunpack.c.l.b16 %v68
  %v250 = vunpack.c.l.b16 %v69
  %v251 = vunpack.c.h.b16 %v69
  %v252 = vunpack.c.l.b16 %v70
  %v253 = vunpack.c.l.b16 %v71
  %v254 = vunpack.c.h.b16 %v71
  %v255 = vunpack.c.l.b16 %v72
  %v256 = vunpack.c.l.b16 %v73
  %v257 = vunpack.c.h.b16 %v73
  %v258 = vunpack.c.l.b16 %v74
  %v259 = vunpack.c.l.b16 %v75
  %v260 = vunpack.c.h.b16 %v75
  %v261 = vunpack.c.l.b16 %v76
  %v262 = vunpack.c.l.b16 %v77
  %v263 = vunpack.c.h.b16 %v77
  %v264 = vunpack.c.l.b16 %v78
  %v265 = vunpack.c.l.b16 %v79
  %v266 = vunpack.c.h.b16 %v79
  %v267 = vunpack.c.l.b16 %v80
  %v268 = vpack.c.b16 %v175, %v172
  %v269 = vpack.c.b16 %v176, %v173
  %v270 = vpack.c.b16 %v177, %v174
  %v271 = vpack.c.b16 %v181, %v178
  %v272 = vpack.c.b16 %v182, %v179
  %v273 = vpack.c.b16 %v183, %v180
  %v274 = vpack.c.b16 %v187, %v184
  %v275 = vpack.c.b16 %v188, %v185
  %v276 = vpack.c.b16 %v189, %v186
  %v277 = vpack.c.b16 %v193, %v190
  %v278 = vpack.c.b16 %v194, %v191
  %v279 = vpack.c.b16 %v195, %v192
  %v280 = vpack.c.b16 %v199, %v196
  %v281 = vpack.c.b16 %v200, %v197
  %v282 = vpack.c.b16 %v201, %v198
  %v283 = vpack.c.b16 %v205, %v202
  %v284 = vpack.c.b16 %v206, %v203
  %v285 = vpack.c.b16 %v207, %v204
  %v286 = vpack.c.b16 %v211, %v208
  %v287 = vpack.c.b16 %v212, %v209
  %v288 = vpack.c.b16 %v213, %v210
  %v289 = vpack.c.b16 %v217, %v214
  %v290 = vpack.c.b16 %v218, %v215
  %v291 = vpack.c.b16 %v219, %v216
  %v292 = vpack.c.b16 %v223, %v220
  %v293 = vpack.c.b16 %v224, %v221
  %v294 = vpack.c.b16 %v225, %v222
  %v295 = vpack.c.b16 %v229, %v226
  %v296 = vpack.c.b16 %v230, %v227
  %v297 = vpack.c.b16 %v231, %v228
  %v298 = vpack.c.b16 %v235, %v232
  %v299 = vpack.c.b16 %v236, %v233
  %v300 = vpack.c.b16 %v237, %v234
  %v301 = vpack.c.b16 %v241, %v238
  %v302 = vpack.c.b16 %v242, %v239
  %v303 = vpack.c.b16 %v243, %v240
  %v304 = vpack.c.b16 %v247, %v244
  %v305 = vpack.c.b16 %v248, %v245
  %v306 = vpack.c.b16 %v249, %v246
  %v307 = vpack.c.b16 %v253, %v250
  %v308 = vpack.c.b16 %v254, %v251
  %v309 = vpack.c.b16 %v255, %v252
  %v310 = vpack.c.b16 %v259, %v256
  %v311 = vpack.c.b16 %v260, %v257
  %v312 = vpack.c.b16 %v261, %v258
  %v313 = vpack.c.b16 %v265, %v262
  %v314 = vpack.c.b16 %v266, %v263
  %v315 = vpack.c.b16 %v267, %v264
  %364 = vmatprep.subr.bf16.mxu0 %v290
  %365 = vmatpush1.bf16.msra.mxu0 %v289
  %366 = vmatprep.subr.bf16.mxu0 %v287
  %367 = vmatpush1.bf16.msra.mxu0 %v286
  %368 = vmatprep.subr.bf16.mxu0 %v284
  %369 = vmatpush1.bf16.msra.mxu0 %v283
  %370 = vmatprep.subr.bf16.mxu0 %v281
  %371 = vmatpush1.bf16.msra.mxu0 %v280
  %372 = vmatprep.subr.bf16.mxu0 %v278
  %373 = vmatpush1.bf16.msra.mxu0 %v277
  %374 = vmatprep.subr.bf16.mxu0 %v275
  %375 = vmatpush1.bf16.msra.mxu0 %v274
  %376 = vmatprep.subr.bf16.mxu0 %v272
  %377 = vmatpush1.bf16.msra.mxu0 %v271
  %378 = vmatprep.subr.bf16.mxu0 %v269
  %379 = vmatpush1.bf16.msra.mxu0 %v268
  %380 = vmatprep.subr.bf16.mxu0 %v314
  %381 = vmatpush2.bf16.msra.mxu0 %v313
  %382 = vmatprep.subr.bf16.mxu0 %v311
  %383 = vmatpush2.bf16.msra.mxu0 %v310
  %384 = vmatprep.subr.bf16.mxu0 %v308
  %385 = vmatpush2.bf16.msra.mxu0 %v307
  %386 = vmatprep.subr.bf16.mxu0 %v305
  %387 = vmatpush2.bf16.msra.mxu0 %v304
  %388 = vmatprep.subr.bf16.mxu0 %v302
  %389 = vmatpush2.bf16.msra.mxu0 %v301
  %390 = vmatprep.subr.bf16.mxu0 %v299
  %391 = vmatpush2.bf16.msra.mxu0 %v298
  %392 = vmatprep.subr.bf16.mxu0 %v296
  %393 = vmatpush2.bf16.msra.mxu0 %v295
  %394 = vmatprep.subr.bf16.mxu0 %v293
  %395 = vmatpush2.bf16.msra.mxu0 %v292
  %396 = vmatprep.mubr.bf16.mxu0 %v105
  %397 = vmatmul.mubr.bf16.gmra.mxu0 %v104
  %v398 = vpop.f32.mrf.mxu0
  %v399 = vadd.f32 %v89, %v398
  %v400 = vpop.f32.mrf.mxu0
  %v401 = vadd.f32 %v93, %v400
  %v402 = vpop.f32.mrf.mxu0
  %v403 = vadd.f32 %v89, %v402
  %v404 = vpop.f32.mrf.mxu0
  %v405 = vadd.f32 %v93, %v404
  %406 = vdwg.mxu0
  %407 = vmatprep.subr.bf16.mxu0 0
  %408 = vmatpush1.bf16.msra.mxu0 %v291
  %409 = vmatprep.subr.bf16.mxu0 0
  %410 = vmatpush1.bf16.msra.mxu0 %v288
  %411 = vmatprep.subr.bf16.mxu0 0
  %412 = vmatpush1.bf16.msra.mxu0 %v285
  %413 = vmatprep.subr.bf16.mxu0 0
  %414 = vmatpush1.bf16.msra.mxu0 %v282
  %415 = vmatprep.subr.bf16.mxu0 0
  %416 = vmatpush1.bf16.msra.mxu0 %v279
  %417 = vmatprep.subr.bf16.mxu0 0
  %418 = vmatpush1.bf16.msra.mxu0 %v276
  %419 = vmatprep.subr.bf16.mxu0 0
  %420 = vmatpush1.bf16.msra.mxu0 %v273
  %421 = vmatprep.subr.bf16.mxu0 0
  %422 = vmatpush1.bf16.msra.mxu0 %v270
  %423 = vmatprep.subr.bf16.mxu0 0
  %424 = vmatpush2.bf16.msra.mxu0 %v315
  %425 = vmatprep.subr.bf16.mxu0 0
  %426 = vmatpush2.bf16.msra.mxu0 %v312
  %427 = vmatprep.subr.bf16.mxu0 0
  %428 = vmatpush2.bf16.msra.mxu0 %v309
  %429 = vmatprep.subr.bf16.mxu0 0
  %430 = vmatpush2.bf16.msra.mxu0 %v306
  %431 = vmatprep.subr.bf16.mxu0 0
  %432 = vmatpush2.bf16.msra.mxu0 %v303
  %433 = vmatprep.subr.bf16.mxu0 0
  %434 = vmatpush2.bf16.msra.mxu0 %v300
  %435 = vmatprep.subr.bf16.mxu0 0
  %436 = vmatpush2.bf16.msra.mxu0 %v297
  %437 = vmatprep.subr.bf16.mxu0 0
  %438 = vmatpush2.bf16.msra.mxu0 %v294
  %439 = vmatprep.mubr.bf16.mxu0 %v105
  %440 = vmatmul.mubr.bf16.gmra.mxu0 %v104
  %v441 = vpop.f32.mrf.mxu0
  %v442 = vadd.f32 %v97, %v441
  %v443 = vpop.f32.mrf.mxu0
  %v444 = vpop.f32.mrf.mxu0
  %v445 = vadd.f32 %v97, %v444
  %v446 = vpop.f32.mrf.mxu0
  %447 = vdwg.mxu0
  %vm448 = vcmp.gt.f32.partialorder %v399, 0.0
  %vm449 = vcmp.gt.f32.partialorder %v401, 0.0
  %vm450 = vcmp.gt.f32.partialorder %v442, 0.0
  %vm451 = vcmp.gt.f32.partialorder %v403, 0.0
  %vm452 = vcmp.gt.f32.partialorder %v405, 0.0
  %vm453 = vcmp.gt.f32.partialorder %v445, 0.0
  %v454 = vmul.f32 %v399, 0.01
  %v455 = vmul.f32 %v401, 0.01
  %v456 = vmul.f32 %v442, 0.01
  %v457 = vmul.f32 %v403, 0.01
  %v458 = vmul.f32 %v405, 0.01
  %v459 = vmul.f32 %v445, 0.01
  %v460 = vsel %vm448, %v399, %v454
  %v461 = vsel %vm449, %v401, %v455
  %v462 = vsel %vm450, %v442, %v456
  %v463 = vsel %vm451, %v403, %v457
  %v464 = vsel %vm452, %v405, %v458
  %v465 = vsel %vm453, %v445, %v459
  %v466 = vld [vmem:[%s2] sm:$0xf]
  %v467 = vld [vmem:[%s2 + $0x8] sm:$0xf]
  %v468 = vld [vmem:[%s2 + $0x10] sm:$0xf]
  %v469 = vld [vmem:[%s2 + $0x18] sm:$0xf]
  %v470 = vld [vmem:[%s2 + $0x20] sm:$0xf]
  %v471 = vld [vmem:[%s2 + $0x28] sm:$0xf]
  %v472 = vld [vmem:[%s2 + $0x30] sm:$0xf]
  %v473 = vld [vmem:[%s2 + $0x38] sm:$0xf]
  %v474 = vld [vmem:[%s2 + $0x40] sm:$0xf]
  %v475 = vld [vmem:[%s2 + $0x48] sm:$0xf]
  %v476 = vld [vmem:[%s2 + $0x50] sm:$0xf]
  %v477 = vld [vmem:[%s2 + $0x58] sm:$0xf]
  %v478 = vld [vmem:[%s2 + $0x60] sm:$0xf]
  %v479 = vld [vmem:[%s2 + $0x68] sm:$0xf]
  %v480 = vld [vmem:[%s2 + $0x70] sm:$0xf]
  %v481 = vld [vmem:[%s2 + $0x78] sm:$0xf]
  %v482 = vld [vmem:[%s2 + $0x80] sm:$0xf]
  %v483 = vld [vmem:[%s2 + $0x88] sm:$0xf]
  %v484 = vld [vmem:[%s2 + $0x90] sm:$0xf]
  %v485 = vld [vmem:[%s2 + $0x98] sm:$0xf]
  %v486 = vld [vmem:[%s2 + $0xa0] sm:$0xf]
  %v487 = vld [vmem:[%s2 + $0xa8] sm:$0xf]
  %v488 = vld [vmem:[%s2 + $0xb0] sm:$0xf]
  %v489 = vld [vmem:[%s2 + $0xb8] sm:$0xf]
  %v490 = vld [vmem:[%s2 + $0xc0] sm:$0xf]
  %v491 = vld [vmem:[%s2 + $0xc8] sm:$0xf]
  %v492 = vld [vmem:[%s2 + $0xd0] sm:$0xf]
  %v493 = vld [vmem:[%s2 + $0xd8] sm:$0xf]
  %v494 = vld [vmem:[%s2 + $0xe0] sm:$0xf]
  %v495 = vld [vmem:[%s2 + $0xe8] sm:$0xf]
  %v496 = vld [vmem:[%s2 + $0xf0] sm:$0xf]
  %v497 = vld [vmem:[%s2 + $0xf8] sm:$0xf]
  %v498 = vld [vmem:[%s2 + $0x100] sm:$0xf]
  %v499 = vld [vmem:[%s2 + $0x108] sm:$0xf]
  %v500 = vld [vmem:[%s2 + $0x110] sm:$0xf]
  %v501 = vld [vmem:[%s2 + $0x118] sm:$0xf]
  %v502 = vld [vmem:[%s2 + $0x120] sm:$0xf]
  %v503 = vld [vmem:[%s2 + $0x128] sm:$0xf]
  %v504 = vld [vmem:[%s2 + $0x130] sm:$0xf]
  %v505 = vld [vmem:[%s2 + $0x138] sm:$0xf]
  %v506 = vld [vmem:[%s2 + $0x140] sm:$0xf]
  %v507 = vld [vmem:[%s2 + $0x148] sm:$0xf]
  %v508 = vld [vmem:[%s2 + $0x150] sm:$0xf]
  %v509 = vld [vmem:[%s2 + $0x158] sm:$0xf]
  %v510 = vld [vmem:[%s2 + $0x160] sm:$0xf]
  %v511 = vld [vmem:[%s2 + $0x168] sm:$0xf]
  %v512 = vld [vmem:[%s2 + $0x170] sm:$0xf]
  %v513 = vld [vmem:[%s2 + $0x178] sm:$0xf]
  %v514 = vpack.c.bf16 %v463, %v460
  %v515 = vpack.c.bf16 %v464, %v461
  %v516 = vpack.c.bf16 %v465, %v462
  %v517 = vld [vmem:[%s2 + $0x180] sm:$0x1]
  %v518 = vunpack.c.l.bf16 %v517
  %v519 = vlaneseq
  %v520 = vshrl.u32 %v519, 7
  %v521 = vsub.s32 0, %v520
  %v522 = vrot.slane %v518, %v521
  %v571 = vunpack.c.l.b16 %v466
  %v572 = vunpack.c.l.b16 %v467
  %v573 = vunpack.c.l.b16 %v468
  %v574 = vunpack.c.l.b16 %v469
  %v575 = vunpack.c.l.b16 %v470
  %v576 = vunpack.c.l.b16 %v471
  %v577 = vunpack.c.l.b16 %v472
  %v578 = vunpack.c.l.b16 %v473
  %v579 = vunpack.c.l.b16 %v474
  %v580 = vunpack.c.l.b16 %v475
  %v581 = vunpack.c.l.b16 %v476
  %v582 = vunpack.c.l.b16 %v477
  %v583 = vunpack.c.l.b16 %v478
  %v584 = vunpack.c.l.b16 %v479
  %v585 = vunpack.c.l.b16 %v480
  %v586 = vunpack.c.l.b16 %v481
  %v587 = vunpack.c.l.b16 %v482
  %v588 = vunpack.c.l.b16 %v483
  %v589 = vunpack.c.l.b16 %v484
  %v590 = vunpack.c.l.b16 %v485
  %v591 = vunpack.c.l.b16 %v486
  %v592 = vunpack.c.l.b16 %v487
  %v593 = vunpack.c.l.b16 %v488
  %v594 = vunpack.c.l.b16 %v489
  %v595 = vunpack.c.l.b16 %v490
  %v596 = vunpack.c.l.b16 %v491
  %v597 = vunpack.c.l.b16 %v492
  %v598 = vunpack.c.l.b16 %v493
  %v599 = vunpack.c.l.b16 %v494
  %v600 = vunpack.c.l.b16 %v495
  %v601 = vunpack.c.l.b16 %v496
  %v602 = vunpack.c.l.b16 %v497
  %v603 = vunpack.c.l.b16 %v498
  %v604 = vunpack.c.l.b16 %v499
  %v605 = vunpack.c.l.b16 %v500
  %v606 = vunpack.c.l.b16 %v501
  %v607 = vunpack.c.l.b16 %v502
  %v608 = vunpack.c.l.b16 %v503
  %v609 = vunpack.c.l.b16 %v504
  %v610 = vunpack.c.l.b16 %v505
  %v611 = vunpack.c.l.b16 %v506
  %v612 = vunpack.c.l.b16 %v507
  %v613 = vunpack.c.l.b16 %v508
  %v614 = vunpack.c.l.b16 %v509
  %v615 = vunpack.c.l.b16 %v510
  %v616 = vunpack.c.l.b16 %v511
  %v617 = vunpack.c.l.b16 %v512
  %v618 = vunpack.c.l.b16 %v513
  %v619 = vpack.c.b16 %v572, %v571
  %v620 = vpack.c.b16 %v574, %v573
  %v621 = vpack.c.b16 %v576, %v575
  %v622 = vpack.c.b16 %v578, %v577
  %v623 = vpack.c.b16 %v580, %v579
  %v624 = vpack.c.b16 %v582, %v581
  %v625 = vpack.c.b16 %v584, %v583
  %v626 = vpack.c.b16 %v586, %v585
  %v627 = vpack.c.b16 %v588, %v587
  %v628 = vpack.c.b16 %v590, %v589
  %v629 = vpack.c.b16 %v592, %v591
  %v630 = vpack.c.b16 %v594, %v593
  %v631 = vpack.c.b16 %v596, %v595
  %v632 = vpack.c.b16 %v598, %v597
  %v633 = vpack.c.b16 %v600, %v599
  %v634 = vpack.c.b16 %v602, %v601
  %v635 = vpack.c.b16 %v604, %v603
  %v636 = vpack.c.b16 %v606, %v605
  %v637 = vpack.c.b16 %v608, %v607
  %v638 = vpack.c.b16 %v610, %v609
  %v639 = vpack.c.b16 %v612, %v611
  %v640 = vpack.c.b16 %v614, %v613
  %v641 = vpack.c.b16 %v616, %v615
  %v642 = vpack.c.b16 %v618, %v617
  %667 = vmatprep.subr.bf16.mxu0 0
  %668 = vmatpush1.bf16.msra.mxu0 %v626
  %669 = vmatprep.subr.bf16.mxu0 0
  %670 = vmatpush1.bf16.msra.mxu0 %v625
  %671 = vmatprep.subr.bf16.mxu0 0
  %672 = vmatpush1.bf16.msra.mxu0 %v624
  %673 = vmatprep.subr.bf16.mxu0 0
  %674 = vmatpush1.bf16.msra.mxu0 %v623
  %675 = vmatprep.subr.bf16.mxu0 0
  %676 = vmatpush1.bf16.msra.mxu0 %v622
  %677 = vmatprep.subr.bf16.mxu0 0
  %678 = vmatpush1.bf16.msra.mxu0 %v621
  %679 = vmatprep.subr.bf16.mxu0 0
  %680 = vmatpush1.bf16.msra.mxu0 %v620
  %681 = vmatprep.subr.bf16.mxu0 0
  %682 = vmatpush1.bf16.msra.mxu0 %v619
  %683 = vmatprep.subr.bf16.mxu0 0
  %684 = vmatpush2.bf16.msra.mxu0 %v634
  %685 = vmatprep.subr.bf16.mxu0 0
  %686 = vmatpush2.bf16.msra.mxu0 %v633
  %687 = vmatprep.subr.bf16.mxu0 0
  %688 = vmatpush2.bf16.msra.mxu0 %v632
  %689 = vmatprep.subr.bf16.mxu0 0
  %690 = vmatpush2.bf16.msra.mxu0 %v631
  %691 = vmatprep.subr.bf16.mxu0 0
  %692 = vmatpush2.bf16.msra.mxu0 %v630
  %693 = vmatprep.subr.bf16.mxu0 0
  %694 = vmatpush2.bf16.msra.mxu0 %v629
  %695 = vmatprep.subr.bf16.mxu0 0
  %696 = vmatpush2.bf16.msra.mxu0 %v628
  %697 = vmatprep.subr.bf16.mxu0 0
  %698 = vmatpush2.bf16.msra.mxu0 %v627
  %699 = vmatprep.mubr.bf16.mxu0 %v515
  %700 = vmatmul.mubr.bf16.gmra.mxu0 %v514
  %v701 = vpop.f32.mrf.mxu0
  %v702 = vadd.f32 %v522, %v701
  %v703 = vpop.f32.mrf.mxu0
  %v704 = vpop.f32.mrf.mxu0
  %v705 = vadd.f32 %v522, %v704
  %v706 = vpop.f32.mrf.mxu0
  %707 = vdwg.mxu0
  %708 = vmatprep.subr.bf16.mxu0 0
  %709 = vmatpush1.bf16.msra.mxu0 %v642
  %710 = vmatprep.subr.bf16.mxu0 0
  %711 = vmatpush1.bf16.msra.mxu0 %v641
  %712 = vmatprep.subr.bf16.mxu0 0
  %713 = vmatpush1.bf16.msra.mxu0 %v640
  %714 = vmatprep.subr.bf16.mxu0 0
  %715 = vmatpush1.bf16.msra.mxu0 %v639
  %716 = vmatprep.subr.bf16.mxu0 0
  %717 = vmatpush1.bf16.msra.mxu0 %v638
  %718 = vmatprep.subr.bf16.mxu0 0
  %719 = vmatpush1.bf16.msra.mxu0 %v637
  %720 = vmatprep.subr.bf16.mxu0 0
  %721 = vmatpush1.bf16.msra.mxu0 %v636
  %722 = vmatprep.subr.bf16.mxu0 0
  %723 = vmatpush1.bf16.msra.mxu0 %v635
  %724 = vmatprep.subr.bf16.mxu0 0
  %725 = vmatpush2.bf16.msra.mxu0 0
  %726 = vmatprep.subr.bf16.mxu0 0
  %727 = vmatpush2.bf16.msra.mxu0 0
  %728 = vmatprep.subr.bf16.mxu0 0
  %729 = vmatpush2.bf16.msra.mxu0 0
  %730 = vmatprep.subr.bf16.mxu0 0
  %731 = vmatpush2.bf16.msra.mxu0 0
  %732 = vmatprep.subr.bf16.mxu0 0
  %733 = vmatpush2.bf16.msra.mxu0 0
  %734 = vmatprep.subr.bf16.mxu0 0
  %735 = vmatpush2.bf16.msra.mxu0 0
  %736 = vmatprep.subr.bf16.mxu0 0
  %737 = vmatpush2.bf16.msra.mxu0 0
  %738 = vmatprep.subr.bf16.mxu0 0
  %739 = vmatpush2.bf16.msra.mxu0 0
  %740 = vmatprep.mubr.bf16.mxu0 0
  %741 = vmatmul.mubr.bf16.gmra.mxu0 %v516
  %v742 = vpop.f32.mrf.mxu0
  %v743 = vadd.f32 %v702, %v742
  %v744 = vpop.f32.mrf.mxu0
  %v745 = vpop.f32.mrf.mxu0
  %v746 = vadd.f32 %v705, %v745
  %v747 = vpop.f32.mrf.mxu0
  %748 = vdwg.mxu0
  %vm749 = vcmp.gt.f32.partialorder %v743, 0.0
  %vm750 = vcmp.gt.f32.partialorder %v746, 0.0
  %v751 = vmul.f32 %v743, 0.01
  %v752 = vmul.f32 %v746, 0.01
  %v753 = vsel %vm749, %v743, %v751
  %v754 = vsel %vm750, %v746, %v752
  %v755 = vld [vmem:[%s2 + $0x190] sm:$0xf]
  %v756 = vld [vmem:[%s2 + $0x198] sm:$0xf]
  %v757 = vld [vmem:[%s2 + $0x1a0] sm:$0xf]
  %v758 = vld [vmem:[%s2 + $0x1a8] sm:$0xf]
  %v759 = vld [vmem:[%s2 + $0x1b0] sm:$0xf]
  %v760 = vld [vmem:[%s2 + $0x1b8] sm:$0xf]
  %v761 = vld [vmem:[%s2 + $0x1c0] sm:$0xf]
  %v762 = vld [vmem:[%s2 + $0x1c8] sm:$0xf]
  %v763 = vpack.c.bf16 %v754, %v753
  %v764 = vld [vmem:[%s2 + $0x1d0] sm:$0x1]
  %v765 = vunpack.c.l.bf16 %v764
  %v766 = vlaneseq
  %v767 = vshrl.u32 %v766, 7
  %v768 = vsub.s32 0, %v767
  %v769 = vrot.slane %v765, %v768
  %v778 = vunpack.c.l.b16 %v755
  %v779 = vunpack.c.l.b16 %v756
  %v780 = vunpack.c.l.b16 %v757
  %v781 = vunpack.c.l.b16 %v758
  %v782 = vunpack.c.l.b16 %v759
  %v783 = vunpack.c.l.b16 %v760
  %v784 = vunpack.c.l.b16 %v761
  %v785 = vunpack.c.l.b16 %v762
  %v786 = vpack.c.b16 %v779, %v778
  %v787 = vpack.c.b16 %v781, %v780
  %v788 = vpack.c.b16 %v783, %v782
  %v789 = vpack.c.b16 %v785, %v784
  %vm794 = vcmask 523264
  %v796 = vsel %vm794, %v763, 0
  %798 = vmatprep.subr.bf16.mxu0 0
  %799 = vmatpush1.bf16.msra.mxu0 0
  %800 = vmatprep.subr.bf16.mxu0 0
  %801 = vmatpush1.bf16.msra.mxu0 0
  %802 = vmatprep.subr.bf16.mxu0 0
  %803 = vmatpush1.bf16.msra.mxu0 0
  %804 = vmatprep.subr.bf16.mxu0 0
  %805 = vmatpush1.bf16.msra.mxu0 0
  %806 = vmatprep.subr.bf16.mxu0 0
  %807 = vmatpush1.bf16.msra.mxu0 %v789
  %808 = vmatprep.subr.bf16.mxu0 0
  %809 = vmatpush1.bf16.msra.mxu0 %v788
  %810 = vmatprep.subr.bf16.mxu0 0
  %811 = vmatpush1.bf16.msra.mxu0 %v787
  %812 = vmatprep.subr.bf16.mxu0 0
  %813 = vmatpush1.bf16.msra.mxu0 %v786
  %814 = vmatprep.subr.bf16.mxu0 0
  %815 = vmatpush2.bf16.msra.mxu0 0
  %816 = vmatprep.subr.bf16.mxu0 0
  %817 = vmatpush2.bf16.msra.mxu0 0
  %818 = vmatprep.subr.bf16.mxu0 0
  %819 = vmatpush2.bf16.msra.mxu0 0
  %820 = vmatprep.subr.bf16.mxu0 0
  %821 = vmatpush2.bf16.msra.mxu0 0
  %822 = vmatprep.subr.bf16.mxu0 0
  %823 = vmatpush2.bf16.msra.mxu0 0
  %824 = vmatprep.subr.bf16.mxu0 0
  %825 = vmatpush2.bf16.msra.mxu0 0
  %826 = vmatprep.subr.bf16.mxu0 0
  %827 = vmatpush2.bf16.msra.mxu0 0
  %828 = vmatprep.subr.bf16.mxu0 0
  %829 = vmatpush2.bf16.msra.mxu0 0
  %830 = vmatprep.mubr.bf16.mxu0 0
  %831 = vmatmul.mubr.bf16.gmra.mxu0 %v796
  %v832 = vpop.f32.mrf.mxu0
  %v833 = vadd.f32 %v769, %v832
  %v834 = vpop.f32.mrf.mxu0
  %v835 = vpop.f32.mrf.mxu0
  %v836 = vadd.f32 %v769, %v835
  %v837 = vpop.f32.mrf.mxu0
  %838 = vdwg.mxu0
  %vm839 = vcmp.gt.f32.partialorder %v833, 0.0
  %vm840 = vcmp.gt.f32.partialorder %v836, 0.0
  %v841 = vmul.f32 %v833, 0.01
  %v842 = vmul.f32 %v836, 0.01
  %v843 = vsel %vm839, %v833, %v841
  %v844 = vsel %vm840, %v836, %v842
  %v845 = vld [vmem:[%s2 + $0x1e0] sm:$0xf]
  %v846 = vld [vmem:[%s2 + $0x1e8] sm:$0xf]
  %v847 = vld [vmem:[%s2 + $0x1f0] sm:$0xf]
  %v848 = vld [vmem:[%s2 + $0x1f8] sm:$0xf]
  %v849 = vld [vmem:[%s2 + $0x200] sm:$0xf]
  %v850 = vld [vmem:[%s2 + $0x208] sm:$0xf]
  %v851 = vld [vmem:[%s2 + $0x210] sm:$0xf]
  %v852 = vld [vmem:[%s2 + $0x218] sm:$0xf]
  %v853 = vld [vmem:[%s2 + $0x220] sm:$0xf]
  %v854 = vld [vmem:[%s2 + $0x228] sm:$0xf]
  %v855 = vld [vmem:[%s2 + $0x230] sm:$0xf]
  %v856 = vld [vmem:[%s2 + $0x238] sm:$0xf]
  %v857 = vld [vmem:[%s2 + $0x240] sm:$0xf]
  %v858 = vld [vmem:[%s2 + $0x248] sm:$0xf]
  %v859 = vld [vmem:[%s2 + $0x250] sm:$0xf]
  %v860 = vld [vmem:[%s2 + $0x258] sm:$0xf]
  %v861 = vld [vmem:[%s2 + $0x260] sm:$0x1]
  %v862 = vunpack.c.l.bf16 %v861
  %v863 = vlaneseq
  %v864 = vshrl.u32 %v863, 7
  %v865 = vsub.s32 0, %v864
  %v866 = vrot.slane %v862, %v865
  %v883 = vunpack.c.l.b16 %v845
  %v884 = vunpack.c.l.b16 %v846
  %v885 = vunpack.c.l.b16 %v847
  %v886 = vunpack.c.l.b16 %v848
  %v887 = vunpack.c.l.b16 %v849
  %v888 = vunpack.c.l.b16 %v850
  %v889 = vunpack.c.l.b16 %v851
  %v890 = vunpack.c.l.b16 %v852
  %v891 = vunpack.c.l.b16 %v853
  %v892 = vunpack.c.l.b16 %v854
  %v893 = vunpack.c.l.b16 %v855
  %v894 = vunpack.c.l.b16 %v856
  %v895 = vunpack.c.l.b16 %v857
  %v896 = vunpack.c.l.b16 %v858
  %v897 = vunpack.c.l.b16 %v859
  %v898 = vunpack.c.l.b16 %v860
  %v899 = vpack.c.b16 %v884, %v883
  %v900 = vpack.c.b16 %v886, %v885
  %v901 = vpack.c.b16 %v888, %v887
  %v902 = vpack.c.b16 %v890, %v889
  %v903 = vpack.c.b16 %v892, %v891
  %v904 = vpack.c.b16 %v894, %v893
  %v905 = vpack.c.b16 %v896, %v895
  %v906 = vpack.c.b16 %v898, %v897
  %915 = vmatprep.subr.bf16.mxu0 0
  %916 = vmatpush1.bf16.msra.mxu0 %v906
  %917 = vmatprep.subr.bf16.mxu0 0
  %918 = vmatpush1.bf16.msra.mxu0 %v905
  %919 = vmatprep.subr.bf16.mxu0 0
  %920 = vmatpush1.bf16.msra.mxu0 %v904
  %921 = vmatprep.subr.bf16.mxu0 0
  %922 = vmatpush1.bf16.msra.mxu0 %v903
  %923 = vmatprep.subr.bf16.mxu0 0
  %924 = vmatpush1.bf16.msra.mxu0 %v902
  %925 = vmatprep.subr.bf16.mxu0 0
  %926 = vmatpush1.bf16.msra.mxu0 %v901
  %927 = vmatprep.subr.bf16.mxu0 0
  %928 = vmatpush1.bf16.msra.mxu0 %v900
  %929 = vmatprep.subr.bf16.mxu0 0
  %930 = vmatpush1.bf16.msra.mxu0 %v899
  %931 = vmatprep.subr.bf16.mxu0 0
  %932 = vmatpush2.bf16.msra.mxu0 0
  %933 = vmatprep.subr.bf16.mxu0 0
  %934 = vmatpush2.bf16.msra.mxu0 0
  %935 = vmatprep.subr.bf16.mxu0 0
  %936 = vmatpush2.bf16.msra.mxu0 0
  %937 = vmatprep.subr.bf16.mxu0 0
  %938 = vmatpush2.bf16.msra.mxu0 0
  %939 = vmatprep.subr.bf16.mxu0 0
  %940 = vmatpush2.bf16.msra.mxu0 0
  %941 = vmatprep.subr.bf16.mxu0 0
  %942 = vmatpush2.bf16.msra.mxu0 0
  %943 = vmatprep.subr.bf16.mxu0 0
  %944 = vmatpush2.bf16.msra.mxu0 0
  %945 = vmatprep.subr.bf16.mxu0 0
  %946 = vmatpush2.bf16.msra.mxu0 0
  %947 = vmatprep.mubr.bf16.mxu0 0
  %948 = vmatmul.mubr.bf16.gmra.mxu0 %v105
  %v949 = vpop.f32.mrf.mxu0
  %v950 = vadd.f32 %v866, %v949
  %v951 = vpop.f32.mrf.mxu0
  %v952 = vpop.f32.mrf.mxu0
  %v953 = vadd.f32 %v866, %v952
  %v954 = vpop.f32.mrf.mxu0
  %955 = vdwg.mxu0
  %v956 = vmax.f32 %v950, 0.0
  %v957 = vmax.f32 %v953, 0.0
  %v958 = vld [vmem:[%s2 + $0x270] sm:$0xff]
  %v959 = vld [vmem:[%s2 + $0x278] sm:$0xff]
  %v960 = vld [vmem:[%s2 + $0x280] sm:$0xff]
  %v961 = vld [vmem:[%s2 + $0x288] sm:$0xff]
  %v962 = vld [vmem:[%s2 + $0x290] sm:$0xff]
  %v963 = vld [vmem:[%s2 + $0x298] sm:$0xff]
  %v964 = vld [vmem:[%s2 + $0x2a0] sm:$0xff]
  %v965 = vld [vmem:[%s2 + $0x2a8] sm:$0xff]
  %v966 = vpack.c.bf16 %v844, %v843
  %v967 = vld [vmem:[%s2 + $0x2b0] sm:$0xff]
  %v968 = vld [vmem:[%s2 + $0x2b8] sm:$0xff]
  %v969 = vld [vmem:[%s2 + $0x2c0] sm:$0xff]
  %v970 = vld [vmem:[%s2 + $0x2c8] sm:$0xff]
  %v971 = vpack.c.bf16 %v957, %v956
  %v976 = vunpack.c.l.b16 %v967
  %v977 = vunpack.c.h.b16 %v967
  %v978 = vunpack.c.l.b16 %v968
  %v979 = vunpack.c.h.b16 %v968
  %v980 = vunpack.c.l.b16 %v969
  %v981 = vunpack.c.h.b16 %v969
  %v982 = vunpack.c.l.b16 %v970
  %v983 = vunpack.c.h.b16 %v970
  %v984 = vpack.c.b16 %v978, %v976
  %v985 = vpack.c.b16 %v979, %v977
  %v986 = vpack.c.b16 %v982, %v980
  %v987 = vpack.c.b16 %v983, %v981
  %vm992 = vcmask 261120
  %v994 = vsel %vm992, %v971, 0
  %996 = vmatprep.subr.bf16.mxu0 0
  %997 = vmatpush1.bf16.msra.mxu0 0
  %998 = vmatprep.subr.bf16.mxu0 0
  %999 = vmatpush1.bf16.msra.mxu0 0
  %1000 = vmatprep.subr.bf16.mxu0 0
  %1001 = vmatpush1.bf16.msra.mxu0 0
  %1002 = vmatprep.subr.bf16.mxu0 0
  %1003 = vmatpush1.bf16.msra.mxu0 0
  %1004 = vmatprep.subr.bf16.mxu0 0
  %1005 = vmatpush1.bf16.msra.mxu0 0
  %1006 = vmatprep.subr.bf16.mxu0 0
  %1007 = vmatpush1.bf16.msra.mxu0 0
  %1008 = vmatprep.subr.bf16.mxu0 %v987
  %1009 = vmatpush1.bf16.msra.mxu0 %v986
  %1010 = vmatprep.subr.bf16.mxu0 %v985
  %1011 = vmatpush1.bf16.msra.mxu0 %v984
  %1012 = vmatprep.subr.bf16.mxu0 0
  %1013 = vmatpush2.bf16.msra.mxu0 0
  %1014 = vmatprep.subr.bf16.mxu0 0
  %1015 = vmatpush2.bf16.msra.mxu0 0
  %1016 = vmatprep.subr.bf16.mxu0 0
  %1017 = vmatpush2.bf16.msra.mxu0 0
  %1018 = vmatprep.subr.bf16.mxu0 0
  %1019 = vmatpush2.bf16.msra.mxu0 0
  %1020 = vmatprep.subr.bf16.mxu0 0
  %1021 = vmatpush2.bf16.msra.mxu0 0
  %1022 = vmatprep.subr.bf16.mxu0 0
  %1023 = vmatpush2.bf16.msra.mxu0 0
  %1024 = vmatprep.subr.bf16.mxu0 0
  %1025 = vmatpush2.bf16.msra.mxu0 0
  %1026 = vmatprep.subr.bf16.mxu0 0
  %1027 = vmatpush2.bf16.msra.mxu0 0
  %1028 = vmatprep.mubr.bf16.mxu0 0
  %1029 = vmatmul.mubr.bf16.gmra.mxu0 %v994
  %v1030 = vpop.f32.mrf.mxu0
  %v1031 = vadd.f32 0.0, %v1030
  %v1032 = vpop.f32.mrf.mxu0
  %v1033 = vadd.f32 0.0, %v1032
  %v1034 = vpop.f32.mrf.mxu0
  %v1035 = vadd.f32 0.0, %v1034
  %v1036 = vpop.f32.mrf.mxu0
  %v1037 = vadd.f32 0.0, %v1036
  %1038 = vdwg.mxu0
  %v1047 = vunpack.c.l.b16 %v958
  %v1048 = vunpack.c.h.b16 %v958
  %v1049 = vunpack.c.l.b16 %v959
  %v1050 = vunpack.c.h.b16 %v959
  %v1051 = vunpack.c.l.b16 %v960
  %v1052 = vunpack.c.h.b16 %v960
  %v1053 = vunpack.c.l.b16 %v961
  %v1054 = vunpack.c.h.b16 %v961
  %v1055 = vunpack.c.l.b16 %v962
  %v1056 = vunpack.c.h.b16 %v962
  %v1057 = vunpack.c.l.b16 %v963
  %v1058 = vunpack.c.h.b16 %v963
  %v1059 = vunpack.c.l.b16 %v964
  %v1060 = vunpack.c.h.b16 %v964
  %v1061 = vunpack.c.l.b16 %v965
  %v1062 = vunpack.c.h.b16 %v965
  %v1063 = vpack.c.b16 %v1049, %v1047
  %v1064 = vpack.c.b16 %v1050, %v1048
  %v1065 = vpack.c.b16 %v1053, %v1051
  %v1066 = vpack.c.b16 %v1054, %v1052
  %v1067 = vpack.c.b16 %v1057, %v1055
  %v1068 = vpack.c.b16 %v1058, %v1056
  %v1069 = vpack.c.b16 %v1061, %v1059
  %v1070 = vpack.c.b16 %v1062, %v1060
  %v1080 = vsel %vm794, %v966, 0
  %1082 = vmatprep.subr.bf16.mxu0 0
  %1083 = vmatpush1.bf16.msra.mxu0 0
  %1084 = vmatprep.subr.bf16.mxu0 0
  %1085 = vmatpush1.bf16.msra.mxu0 0
  %1086 = vmatprep.subr.bf16.mxu0 0
  %1087 = vmatpush1.bf16.msra.mxu0 0
  %1088 = vmatprep.subr.bf16.mxu0 0
  %1089 = vmatpush1.bf16.msra.mxu0 0
  %1090 = vmatprep.subr.bf16.mxu0 %v1070
  %1091 = vmatpush1.bf16.msra.mxu0 %v1069
  %1092 = vmatprep.subr.bf16.mxu0 %v1068
  %1093 = vmatpush1.bf16.msra.mxu0 %v1067
  %1094 = vmatprep.subr.bf16.mxu0 %v1066
  %1095 = vmatpush1.bf16.msra.mxu0 %v1065
  %1096 = vmatprep.subr.bf16.mxu0 %v1064
  %1097 = vmatpush1.bf16.msra.mxu0 %v1063
  %1098 = vmatprep.subr.bf16.mxu0 0
  %1099 = vmatpush2.bf16.msra.mxu0 0
  %1100 = vmatprep.subr.bf16.mxu0 0
  %1101 = vmatpush2.bf16.msra.mxu0 0
  %1102 = vmatprep.subr.bf16.mxu0 0
  %1103 = vmatpush2.bf16.msra.mxu0 0
  %1104 = vmatprep.subr.bf16.mxu0 0
  %1105 = vmatpush2.bf16.msra.mxu0 0
  %1106 = vmatprep.subr.bf16.mxu0 0
  %1107 = vmatpush2.bf16.msra.mxu0 0
  %1108 = vmatprep.subr.bf16.mxu0 0
  %1109 = vmatpush2.bf16.msra.mxu0 0
  %1110 = vmatprep.subr.bf16.mxu0 0
  %1111 = vmatpush2.bf16.msra.mxu0 0
  %1112 = vmatprep.subr.bf16.mxu0 0
  %1113 = vmatpush2.bf16.msra.mxu0 0
  %1114 = vmatprep.mubr.bf16.mxu0 0
  %1115 = vmatmul.mubr.bf16.gmra.mxu0 %v1080
  %v1116 = vpop.f32.mrf.mxu0
  %v1117 = vadd.f32 %v1031, %v1116
  %v1118 = vpop.f32.mrf.mxu0
  %v1119 = vadd.f32 %v1033, %v1118
  %v1120 = vpop.f32.mrf.mxu0
  %v1121 = vadd.f32 %v1035, %v1120
  %v1122 = vpop.f32.mrf.mxu0
  %v1123 = vadd.f32 %v1037, %v1122
  %1124 = vdwg.mxu0
  %v1125 = vld [vmem:[%s2 + $0x2d0] sm:$0x11]
  %v1126 = vunpack.c.l.bf16 %v1125
  %v1127 = vunpack.c.h.bf16 %v1125
  %v1128 = vlaneseq
  %v1129 = vshrl.u32 %v1128, 7
  %v1130 = vsub.s32 0, %v1129
  %v1131 = vrot.slane %v1126, %v1130
  %v1132 = vlaneseq
  %v1133 = vshrl.u32 %v1132, 7
  %v1134 = vsub.s32 0, %v1133
  %v1135 = vrot.slane %v1127, %v1134
  %v1136 = vadd.f32 %v1117, %v1131
  %v1137 = vadd.f32 %v1119, %v1135
  %v1138 = vadd.f32 %v1121, %v1131
  %v1139 = vadd.f32 %v1123, %v1135
  %v1140 = vmax.f32 %v1136, 0.0
  %v1141 = vmax.f32 %v1137, 0.0
  %v1142 = vmax.f32 %v1138, 0.0
  %v1143 = vmax.f32 %v1139, 0.0
  %v1144 = vld [vmem:[%s2 + $0x2e0] sm:$0xf]
  %v1145 = vld [vmem:[%s2 + $0x2e8] sm:$0xf]
  %v1146 = vld [vmem:[%s2 + $0x2f0] sm:$0xf]
  %v1147 = vld [vmem:[%s2 + $0x2f8] sm:$0xf]
  %v1148 = vld [vmem:[%s2 + $0x300] sm:$0xf]
  %v1149 = vld [vmem:[%s2 + $0x308] sm:$0xf]
  %v1150 = vld [vmem:[%s2 + $0x310] sm:$0xf]
  %v1151 = vld [vmem:[%s2 + $0x318] sm:$0xf]
  %v1152 = vld [vmem:[%s2 + $0x320] sm:$0xf]
  %v1153 = vld [vmem:[%s2 + $0x328] sm:$0xf]
  %v1154 = vld [vmem:[%s2 + $0x330] sm:$0xf]
  %v1155 = vld [vmem:[%s2 + $0x338] sm:$0xf]
  %v1156 = vld [vmem:[%s2 + $0x340] sm:$0xf]
  %v1157 = vld [vmem:[%s2 + $0x348] sm:$0xf]
  %v1158 = vld [vmem:[%s2 + $0x350] sm:$0xf]
  %v1159 = vld [vmem:[%s2 + $0x358] sm:$0xf]
  %v1160 = vld [vmem:[%s2 + $0x360] sm:$0xf]
  %v1161 = vld [vmem:[%s2 + $0x368] sm:$0xf]
  %v1162 = vld [vmem:[%s2 + $0x370] sm:$0xf]
  %v1163 = vld [vmem:[%s2 + $0x378] sm:$0xf]
  %v1164 = vld [vmem:[%s2 + $0x380] sm:$0xf]
  %v1165 = vld [vmem:[%s2 + $0x388] sm:$0xf]
  %v1166 = vld [vmem:[%s2 + $0x390] sm:$0xf]
  %v1167 = vld [vmem:[%s2 + $0x398] sm:$0xf]
  %v1168 = vpack.c.bf16 %v1142, %v1140
  %v1169 = vpack.c.bf16 %v1143, %v1141
  %v1170 = vld [vmem:[%s2 + $0x3a0] sm:$0x1]
  %v1171 = vunpack.c.l.bf16 %v1170
  %v1172 = vlaneseq
  %v1173 = vshrl.u32 %v1172, 7
  %v1174 = vsub.s32 0, %v1173
  %v1175 = vrot.slane %v1171, %v1174
  %v1200 = vunpack.c.l.b16 %v1144
  %v1201 = vunpack.c.l.b16 %v1145
  %v1202 = vunpack.c.l.b16 %v1146
  %v1203 = vunpack.c.l.b16 %v1147
  %v1204 = vunpack.c.l.b16 %v1148
  %v1205 = vunpack.c.l.b16 %v1149
  %v1206 = vunpack.c.l.b16 %v1150
  %v1207 = vunpack.c.l.b16 %v1151
  %v1208 = vunpack.c.l.b16 %v1152
  %v1209 = vunpack.c.l.b16 %v1153
  %v1210 = vunpack.c.l.b16 %v1154
  %v1211 = vunpack.c.l.b16 %v1155
  %v1212 = vunpack.c.l.b16 %v1156
  %v1213 = vunpack.c.l.b16 %v1157
  %v1214 = vunpack.c.l.b16 %v1158
  %v1215 = vunpack.c.l.b16 %v1159
  %v1216 = vunpack.c.l.b16 %v1160
  %v1217 = vunpack.c.l.b16 %v1161
  %v1218 = vunpack.c.l.b16 %v1162
  %v1219 = vunpack.c.l.b16 %v1163
  %v1220 = vunpack.c.l.b16 %v1164
  %v1221 = vunpack.c.l.b16 %v1165
  %v1222 = vunpack.c.l.b16 %v1166
  %v1223 = vunpack.c.l.b16 %v1167
  %v1224 = vpack.c.b16 %v1201, %v1200
  %v1225 = vpack.c.b16 %v1203, %v1202
  %v1226 = vpack.c.b16 %v1205, %v1204
  %v1227 = vpack.c.b16 %v1207, %v1206
  %v1228 = vpack.c.b16 %v1209, %v1208
  %v1229 = vpack.c.b16 %v1211, %v1210
  %v1230 = vpack.c.b16 %v1213, %v1212
  %v1231 = vpack.c.b16 %v1215, %v1214
  %v1232 = vpack.c.b16 %v1217, %v1216
  %v1233 = vpack.c.b16 %v1219, %v1218
  %v1234 = vpack.c.b16 %v1221, %v1220
  %v1235 = vpack.c.b16 %v1223, %v1222
  %v1249 = vsel %vm794, %v1169, 0
  %1251 = vmatprep.subr.bf16.mxu0 0
  %1252 = vmatpush1.bf16.msra.mxu0 %v1231
  %1253 = vmatprep.subr.bf16.mxu0 0
  %1254 = vmatpush1.bf16.msra.mxu0 %v1230
  %1255 = vmatprep.subr.bf16.mxu0 0
  %1256 = vmatpush1.bf16.msra.mxu0 %v1229
  %1257 = vmatprep.subr.bf16.mxu0 0
  %1258 = vmatpush1.bf16.msra.mxu0 %v1228
  %1259 = vmatprep.subr.bf16.mxu0 0
  %1260 = vmatpush1.bf16.msra.mxu0 %v1227
  %1261 = vmatprep.subr.bf16.mxu0 0
  %1262 = vmatpush1.bf16.msra.mxu0 %v1226
  %1263 = vmatprep.subr.bf16.mxu0 0
  %1264 = vmatpush1.bf16.msra.mxu0 %v1225
  %1265 = vmatprep.subr.bf16.mxu0 0
  %1266 = vmatpush1.bf16.msra.mxu0 %v1224
  %1267 = vmatprep.subr.bf16.mxu0 0
  %1268 = vmatpush2.bf16.msra.mxu0 0
  %1269 = vmatprep.subr.bf16.mxu0 0
  %1270 = vmatpush2.bf16.msra.mxu0 0
  %1271 = vmatprep.subr.bf16.mxu0 0
  %1272 = vmatpush2.bf16.msra.mxu0 0
  %1273 = vmatprep.subr.bf16.mxu0 0
  %1274 = vmatpush2.bf16.msra.mxu0 0
  %1275 = vmatprep.subr.bf16.mxu0 0
  %1276 = vmatpush2.bf16.msra.mxu0 %v1235
  %1277 = vmatprep.subr.bf16.mxu0 0
  %1278 = vmatpush2.bf16.msra.mxu0 %v1234
  %1279 = vmatprep.subr.bf16.mxu0 0
  %1280 = vmatpush2.bf16.msra.mxu0 %v1233
  %1281 = vmatprep.subr.bf16.mxu0 0
  %1282 = vmatpush2.bf16.msra.mxu0 %v1232
  %1283 = vmatprep.mubr.bf16.mxu0 %v1249
  %1284 = vmatmul.mubr.bf16.gmra.mxu0 %v1168
  %v1285 = vpop.f32.mrf.mxu0
  %v1286 = vadd.f32 %v1175, %v1285
  %v1287 = vpop.f32.mrf.mxu0
  %v1288 = vpop.f32.mrf.mxu0
  %v1289 = vadd.f32 %v1175, %v1288
  %v1290 = vpop.f32.mrf.mxu0
  %1291 = vdwg.mxu0
  %v1292 = vmax.f32 %v1286, 0.0
  %v1293 = vmax.f32 %v1289, 0.0
  %v1294 = vld [vmem:[%s2 + $0x3b0] sm:$0xf]
  %v1295 = vld [vmem:[%s2 + $0x3b8] sm:$0xf]
  %v1296 = vld [vmem:[%s2 + $0x3c0] sm:$0xf]
  %v1297 = vld [vmem:[%s2 + $0x3c8] sm:$0xf]
  %v1298 = vld [vmem:[%s2 + $0x3d0] sm:$0xf]
  %v1299 = vld [vmem:[%s2 + $0x3d8] sm:$0xf]
  %v1300 = vld [vmem:[%s2 + $0x3e0] sm:$0xf]
  %v1301 = vld [vmem:[%s2 + $0x3e8] sm:$0xf]
  %v1302 = vpack.c.bf16 %v1293, %v1292
  %v1303 = vld [vmem:[%s2 + $0x3f0] sm:$0x1]
  %v1304 = vunpack.c.l.bf16 %v1303
  %v1305 = vlaneseq
  %v1306 = vshrl.u32 %v1305, 7
  %v1307 = vsub.s32 0, %v1306
  %v1308 = vrot.slane %v1304, %v1307
  %v1317 = vunpack.c.l.b16 %v1294
  %v1318 = vunpack.c.l.b16 %v1295
  %v1319 = vunpack.c.l.b16 %v1296
  %v1320 = vunpack.c.l.b16 %v1297
  %v1321 = vunpack.c.l.b16 %v1298
  %v1322 = vunpack.c.l.b16 %v1299
  %v1323 = vunpack.c.l.b16 %v1300
  %v1324 = vunpack.c.l.b16 %v1301
  %v1325 = vpack.c.b16 %v1318, %v1317
  %v1326 = vpack.c.b16 %v1320, %v1319
  %v1327 = vpack.c.b16 %v1322, %v1321
  %v1328 = vpack.c.b16 %v1324, %v1323
  %v1334 = vsel %vm794, %v1302, 0
  %1336 = vmatprep.subr.bf16.mxu0 0
  %1337 = vmatpush1.bf16.msra.mxu0 0
  %1338 = vmatprep.subr.bf16.mxu0 0
  %1339 = vmatpush1.bf16.msra.mxu0 0
  %1340 = vmatprep.subr.bf16.mxu0 0
  %1341 = vmatpush1.bf16.msra.mxu0 0
  %1342 = vmatprep.subr.bf16.mxu0 0
  %1343 = vmatpush1.bf16.msra.mxu0 0
  %1344 = vmatprep.subr.bf16.mxu0 0
  %1345 = vmatpush1.bf16.msra.mxu0 %v1328
  %1346 = vmatprep.subr.bf16.mxu0 0
  %1347 = vmatpush1.bf16.msra.mxu0 %v1327
  %1348 = vmatprep.subr.bf16.mxu0 0
  %1349 = vmatpush1.bf16.msra.mxu0 %v1326
  %1350 = vmatprep.subr.bf16.mxu0 0
  %1351 = vmatpush1.bf16.msra.mxu0 %v1325
  %1352 = vmatprep.subr.bf16.mxu0 0
  %1353 = vmatpush2.bf16.msra.mxu0 0
  %1354 = vmatprep.subr.bf16.mxu0 0
  %1355 = vmatpush2.bf16.msra.mxu0 0
  %1356 = vmatprep.subr.bf16.mxu0 0
  %1357 = vmatpush2.bf16.msra.mxu0 0
  %1358 = vmatprep.subr.bf16.mxu0 0
  %1359 = vmatpush2.bf16.msra.mxu0 0
  %1360 = vmatprep.subr.bf16.mxu0 0
  %1361 = vmatpush2.bf16.msra.mxu0 0
  %1362 = vmatprep.subr.bf16.mxu0 0
  %1363 = vmatpush2.bf16.msra.mxu0 0
  %1364 = vmatprep.subr.bf16.mxu0 0
  %1365 = vmatpush2.bf16.msra.mxu0 0
  %1366 = vmatprep.subr.bf16.mxu0 0
  %1367 = vmatpush2.bf16.msra.mxu0 0
  %1368 = vmatprep.mubr.bf16.mxu0 0
  %1369 = vmatmul.mubr.bf16.gmra.mxu0 %v1334
  %v1370 = vpop.f32.mrf.mxu0
  %v1371 = vadd.f32 %v1308, %v1370
  %v1372 = vpop.f32.mrf.mxu0
  %v1373 = vpop.f32.mrf.mxu0
  %v1374 = vadd.f32 %v1308, %v1373
  %v1375 = vpop.f32.mrf.mxu0
  %1376 = vdwg.mxu0
  %1377 = vst [vmem:[%s3] sm:$0xff] %v1371
  %1378 = vst [vmem:[%s3 + $0x8] sm:$0xff] %v1374
  // Predicated region
  $region14: #{forward.1} parent=0 // pred_check
    _
  $region15: #{forward.1} parent=0 // pred_check_branch
    %1380 = sbr.rel (0) target = $region17
  $region16: #{forward.1} parent=0 // pred_region
    _
  $region17: #{forward.1} parent=0 // pred_fallthru
    _
  // Predicated region
  $region18: #{forward.1} parent=0 // pred_check
    _
  $region19: #{forward.1} parent=0 // pred_check_branch
    %1382 = sbr.rel (0) target = $region21
  $region20: #{forward.1} parent=0 // pred_region
    _
  $region21: #{forward.1} parent=0 // pred_fallthru
    _

</llo_original>
